<compile_context>
chip_gen: v7x
topology: tpu7x:2x2x1
jax: 0.10.0
libtpu: 0.0.40
codegen_flags: <defaults>
</compile_context>

<pallas_src>
import jax
import jax.numpy as jnp
from jax.experimental import pallas as pl
from jax.experimental.pallas import tpu as pltpu

_LANE = 128
_SUBLANE = 8
_MAX_BLOCK_ROWS = 2048       # 262,144 points / block: ~5 MiB of HBM per step
_SPLIT_THRESHOLD_ROWS = 64   # >= 8192 points: worth >= 2 grid steps for v7x


def _round_up(x, m):
    return (x + m - 1) // m * m


def _mapping_kernel(x_ref, wb_ref, o_ref):
    # x_ref : (3, R, 128) f32 VMEM  -- channel planes (x, y, t), points lane-dense
    # wb_ref: (8,)        f32 SMEM  -- [w00, w01, w10, w11, w20, w21, b0, b1]
    # o_ref : (2, R, 128) f32 VMEM  -- uv planes
    x0 = x_ref[0]
    x1 = x_ref[1]
    x2 = x_ref[2]
    # Hoisted scalar reads: one SMEM load + broadcast each per grid step.
    w00 = wb_ref[0]
    w01 = wb_ref[1]
    w10 = wb_ref[2]
    w11 = wb_ref[3]
    w20 = wb_ref[4]
    w21 = wb_ref[5]
    b0 = wb_ref[6]
    b1 = wb_ref[7]
    # _get_uv: tanh(mapping(xyt).to(float32)); everything is f32 already.
    # TODO(synk): on v7x, confirm jnp.tanh lowers to the single EUP op (not an
    # exp-based expansion); on v5e/v6e the EUP slot has ample slack either way.
    o_ref[0] = jnp.tanh(x0 * w00 + x1 * w10 + x2 * w20 + b0)
    o_ref[1] = jnp.tanh(x0 * w01 + x1 * w11 + x2 * w21 + b1)


def _choose_blocking(rows8):
    """Pick (block_rows, steps): blocks as big as possible, even grid once it matters."""
    block_rows = min(_MAX_BLOCK_ROWS, rows8)
    steps = pl.cdiv(rows8, block_rows)
    if steps == 1 and rows8 >= _SPLIT_THRESHOLD_ROWS:
        # Large single block: split in two so both v7x TensorCores get work.
        block_rows = _round_up(pl.cdiv(rows8, 2), _SUBLANE)
        steps = pl.cdiv(rows8, block_rows)
    elif steps > 1 and steps % 2 == 1:
        # Keep the grid even for v7x: shrink the block slightly.
        block_rows = min(_MAX_BLOCK_ROWS,
                         _round_up(pl.cdiv(rows8, steps + 1), _SUBLANE))
        steps = pl.cdiv(rows8, block_rows)
    return block_rows, steps


def mapping_uv_channels_first(xyt_cf, weight, bias):
    """uv = tanh(W^T xyt + b), channels-first.

    xyt_cf: [3, N] f32 (x/y/t planes)  ->  uv: [2, N] f32 (u/v planes).
    Fast path (zero HBM layout traffic) when N % 1024 == 0; otherwise a small
    tail-alignment pad is added.
    """
    C, N = xyt_cf.shape
    assert C == 3 and weight.shape == (3, 2) and bias.shape == (2,)

    x = xyt_cf.astype(jnp.float32)
    rows = pl.cdiv(N, _LANE)
    rows8 = _round_up(max(rows, 1), _SUBLANE)
    n_pad = rows8 * _LANE
    if n_pad != N:
        # Alignment pad only when N is not a multiple of 1024 (tail handling).
        x = jnp.pad(x, ((0, 0), (0, n_pad - N)))
    x = x.reshape(3, rows8, _LANE)            # free: contiguous reshape

    block_rows, steps = _choose_blocking(rows8)

    # Flat (8,) SMEM parameter block: 6 weights + 2 biases (no 2-D SMEM padding).
    wb = jnp.concatenate(
        [weight.astype(jnp.float32).reshape(-1), bias.astype(jnp.float32)])

    cost = pl.CostEstimate(
        flops=12 * n_pad,              # 2 outputs x (3 mul + 2 add + bias add)
        transcendentals=2 * n_pad,     # 2 tanh per point
        bytes_accessed=(3 + 2) * 4 * n_pad + 4 * 8,
    )

    out = pl.pallas_call(
        _mapping_kernel,
        out_shape=jax.ShapeDtypeStruct((2, rows8, _LANE), jnp.float32),
        grid_spec=pltpu.PrefetchScalarGridSpec(
            num_scalar_prefetch=0,
            grid=(steps,),
            in_specs=[
                pl.BlockSpec((3, block_rows, _LANE), lambda i: (0, i, 0)),
                pl.BlockSpec(memory_space=pltpu.MemorySpace.SMEM),   # (8,) params
            ],
            out_specs=pl.BlockSpec((2, block_rows, _LANE), lambda i: (0, i, 0)),
        ),
        compiler_params=pltpu.CompilerParams(
            dimension_semantics=("parallel",),
            vmem_limit_bytes=32 * 1024 * 1024,  # 10 MiB double-buffered + headroom
        ),
        cost_estimate=cost,
    )(x, wb)

    uv = out.reshape(2, n_pad)                # free: contiguous reshape
    if n_pad != N:
        uv = uv[:, :N]
    return uv


def base_mapping_network_forward(xyt, weight, bias):
    """Module-compatible interface: xyt [N, 3] -> uv [N, 2].

    Kept for parity with BaseMappingNetwork.forward's calling convention; the
    two transposes here are pure layout plumbing -- hot paths should store
    point data channels-first and call mapping_uv_channels_first directly.
    """
    N, C = xyt.shape
    assert C == 3
    uv_cf = mapping_uv_channels_first(jnp.transpose(xyt), weight, bias)
    return jnp.transpose(uv_cf)


if __name__ == "__main__":
    # xyt = N points of (x, y, t); input_dim = 3, output_dim = 2 (uv).
    N = 2048
    key = jax.random.PRNGKey(0)
    k_x, k_w, k_b, k_m = jax.random.split(key, 4)

    # Channels-first point data (recommended layout: no transposes anywhere).
    xyt_cf = jax.random.normal(k_x, (3, N), dtype=jnp.float32)
    # TODO(synk): BaseMappingNetwork never defines self.model_mapping (subclasses
    # provide it); substituting a deterministic linear 3 -> 2 mapping head.
    weight = jax.random.normal(k_w, (3, 2), dtype=jnp.float32) * 0.5
    bias = jax.random.normal(k_b, (2,), dtype=jnp.float32) * 0.1

    # TODO(synk): return_residual / return_rgb branches need model_residual /
    # model_texture built from unspecified network types; only the default
    # path (return uv) is implemented.
    uv_cf = jax.block_until_ready(mapping_uv_channels_first(xyt_cf, weight, bias))

    # Plain-JAX elementwise f32 reference (same math order as the kernel).
    ref0 = jnp.tanh(xyt_cf[0] * weight[0, 0] + xyt_cf[1] * weight[1, 0]
                    + xyt_cf[2] * weight[2, 0] + bias[0])
    ref1 = jnp.tanh(xyt_cf[0] * weight[0, 1] + xyt_cf[1] * weight[1, 1]
                    + xyt_cf[2] * weight[2, 1] + bias[1])
    ref_cf = jnp.stack([ref0, ref1])
    assert uv_cf.shape == (2, N)
    assert uv_cf.dtype == jnp.float32
    assert jnp.max(jnp.abs(uv_cf - ref_cf)) < 1e-5

    # Module-compatible [N, 3] path; also exercises the ragged-tail alignment.
    M = 333
    xyt = jax.random.normal(k_m, (M, 3), dtype=jnp.float32)
    uv = jax.block_until_ready(base_mapping_network_forward(xyt, weight, bias))
    ref_m = jnp.tanh(xyt[:, 0:1] * weight[0] + xyt[:, 1:2] * weight[1]
                     + xyt[:, 2:3] * weight[2] + bias)
    assert uv.shape == (M, 2)
    assert uv.dtype == jnp.float32
    assert jnp.max(jnp.abs(uv - ref_m)) < 1e-5

    print("KERNEL_OK")
</pallas_src>

<mosaic_0001>
module attributes {stable_mosaic.version = 11 : i64} {
  func.func @_mapping_kernel(%arg0: i32, %arg1: memref<3x16x128xf32, #tpu.memory_space<vmem>>, %arg2: memref<8xf32, #tpu.memory_space<smem>>, %arg3: memref<2x16x128xf32, #tpu.memory_space<vmem>>) attributes {dimension_semantics = [#tpu.dimension_semantics<parallel>], iteration_bounds = array<i64: 1>, scalar_prefetch = 0 : i64, scratch_operands = 0 : i64, tpu.core_type = #tpu.core_type<tc>, window_params = [{transform_indices = @transform_0, window_bounds = array<i64: 3, 16, 128>}, {transform_indices = @transform_1, window_bounds = array<i64: 8>}, {transform_indices = @transform_2, window_bounds = array<i64: 2, 16, 128>}]} {
    %c0 = arith.constant 0 : index
    %c0_0 = arith.constant 0 : index
    %c0_1 = arith.constant 0 : index
    %0 = vector.load %arg1[%c0, %c0_0, %c0_1] : memref<3x16x128xf32, #tpu.memory_space<vmem>>, vector<1x16x128xf32>
    %1 = vector.shape_cast %0 : vector<1x16x128xf32> to vector<16x128xf32>
    %c1 = arith.constant 1 : index
    %c0_2 = arith.constant 0 : index
    %c0_3 = arith.constant 0 : index
    %2 = vector.load %arg1[%c1, %c0_2, %c0_3] : memref<3x16x128xf32, #tpu.memory_space<vmem>>, vector<1x16x128xf32>
    %3 = vector.shape_cast %2 : vector<1x16x128xf32> to vector<16x128xf32>
    %c2 = arith.constant 2 : index
    %c0_4 = arith.constant 0 : index
    %c0_5 = arith.constant 0 : index
    %4 = vector.load %arg1[%c2, %c0_4, %c0_5] : memref<3x16x128xf32, #tpu.memory_space<vmem>>, vector<1x16x128xf32>
    %5 = vector.shape_cast %4 : vector<1x16x128xf32> to vector<16x128xf32>
    %c0_6 = arith.constant 0 : index
    %6 = memref.load %arg2[%c0_6] : memref<8xf32, #tpu.memory_space<smem>>
    %c1_7 = arith.constant 1 : index
    %7 = memref.load %arg2[%c1_7] : memref<8xf32, #tpu.memory_space<smem>>
    %c2_8 = arith.constant 2 : index
    %8 = memref.load %arg2[%c2_8] : memref<8xf32, #tpu.memory_space<smem>>
    %c3 = arith.constant 3 : index
    %9 = memref.load %arg2[%c3] : memref<8xf32, #tpu.memory_space<smem>>
    %c4 = arith.constant 4 : index
    %10 = memref.load %arg2[%c4] : memref<8xf32, #tpu.memory_space<smem>>
    %c5 = arith.constant 5 : index
    %11 = memref.load %arg2[%c5] : memref<8xf32, #tpu.memory_space<smem>>
    %c6 = arith.constant 6 : index
    %12 = memref.load %arg2[%c6] : memref<8xf32, #tpu.memory_space<smem>>
    %c7 = arith.constant 7 : index
    %13 = memref.load %arg2[%c7] : memref<8xf32, #tpu.memory_space<smem>>
    %14 = vector.broadcast %6 : f32 to vector<16x128xf32>
    %15 = arith.mulf %1, %14 : vector<16x128xf32>
    %16 = vector.broadcast %8 : f32 to vector<16x128xf32>
    %17 = arith.mulf %3, %16 : vector<16x128xf32>
    %18 = arith.addf %15, %17 : vector<16x128xf32>
    %19 = vector.broadcast %10 : f32 to vector<16x128xf32>
    %20 = arith.mulf %5, %19 : vector<16x128xf32>
    %21 = arith.addf %18, %20 : vector<16x128xf32>
    %22 = vector.broadcast %12 : f32 to vector<16x128xf32>
    %23 = arith.addf %21, %22 : vector<16x128xf32>
    %24 = math.tanh %23 : vector<16x128xf32>
    %c0_9 = arith.constant 0 : index
    %c0_10 = arith.constant 0 : index
    %c0_11 = arith.constant 0 : index
    %25 = vector.load %arg3[%c0_9, %c0_10, %c0_11] : memref<2x16x128xf32, #tpu.memory_space<vmem>>, vector<1x16x128xf32>
    %26 = vector.shape_cast %25 : vector<1x16x128xf32> to vector<16x128xf32>
    %27 = vector.shape_cast %24 : vector<16x128xf32> to vector<1x16x128xf32>
    tpu.vector_store %arg3[%c0_9, %c0_10, %c0_11], %27 {strides = array<i32>} : memref<2x16x128xf32, #tpu.memory_space<vmem>>, vector<1x16x128xf32>,
    %28 = vector.broadcast %7 : f32 to vector<16x128xf32>
    %29 = arith.mulf %1, %28 : vector<16x128xf32>
    %30 = vector.broadcast %9 : f32 to vector<16x128xf32>
    %31 = arith.mulf %3, %30 : vector<16x128xf32>
    %32 = arith.addf %29, %31 : vector<16x128xf32>
    %33 = vector.broadcast %11 : f32 to vector<16x128xf32>
    %34 = arith.mulf %5, %33 : vector<16x128xf32>
    %35 = arith.addf %32, %34 : vector<16x128xf32>
    %36 = vector.broadcast %13 : f32 to vector<16x128xf32>
    %37 = arith.addf %35, %36 : vector<16x128xf32>
    %38 = math.tanh %37 : vector<16x128xf32>
    %c1_12 = arith.constant 1 : index
    %c0_13 = arith.constant 0 : index
    %c0_14 = arith.constant 0 : index
    %39 = vector.load %arg3[%c1_12, %c0_13, %c0_14] : memref<2x16x128xf32, #tpu.memory_space<vmem>>, vector<1x16x128xf32>
    %40 = vector.shape_cast %39 : vector<1x16x128xf32> to vector<16x128xf32>
    %41 = vector.shape_cast %38 : vector<16x128xf32> to vector<1x16x128xf32>
    tpu.vector_store %arg3[%c1_12, %c0_13, %c0_14], %41 {strides = array<i32>} : memref<2x16x128xf32, #tpu.memory_space<vmem>>, vector<1x16x128xf32>,
    return
  }
  func.func @transform_0(%arg0: i32) -> (i32, i32, i32) {
    %c0_i32 = arith.constant 0 : i32
    %c0_i32_0 = arith.constant 0 : i32
    %c0_i32_1 = arith.constant 0 : i32
    return %c0_i32, %arg0, %c0_i32_0 : i32, i32, i32
  }
  func.func @transform_1(%arg0: i32) -> i32 {
    %c0_i32 = arith.constant 0 : i32
    %c0_i32_0 = arith.constant 0 : i32
    return %c0_i32 : i32
  }
  func.func @transform_2(%arg0: i32) -> (i32, i32, i32) {
    %c0_i32 = arith.constant 0 : i32
    %c0_i32_0 = arith.constant 0 : i32
    %c0_i32_1 = arith.constant 0 : i32
    return %c0_i32, %arg0, %c0_i32_0 : i32, i32, i32
  }
}

</mosaic_0001>

<llo_original>
// kernel: tpu_custom_call.1
$region0: #{tpu_custom_call.1}
  #allocation0 [shape = 'u32[]', space=smem, size = 0x4, offset = 0x4, fixed_abs, tag = 'smem constant byte address 0x4 - core index']
  #allocation1 [shape = 'u32[144,128]{1,0:T(1,128)}', space=vmem, size = 0x12000, scoped, tag = 'internal scratch']
  %s0 = inlined_call_operand.hbm [shape: f32[3,16,128], index: 0, kind: input, shape index: {}]
  %s1 = inlined_call_operand.vmem [shape: f32[8], index: 1, kind: input, shape index: {}]
  %s2 = inlined_call_operand.hbm [shape: f32[2,16,128], index: 2, kind: output, shape index: {}]
  %s3 = sld [smem:[#allocation0]]
  $region26: #{tpu_custom_call.1} parent=0
    _
  %s5 = ssub.s32 1, %s3
  %s6 = scalar_select 0, %s5, %s3
  $region1: #{tpu_custom_call.1} parent=0
    #allocation2 [shape = 'u8[24576]{0}', space=vmem, size = 0x6000, scoped, tag = 'input window, operand 0, single buffered']
    #allocation3 [shape = 's32[1]{0}', space=sflag, size = 0x4, scoped, tag = 'scoped memory for tpu_custom_call.1']
    #allocation4 [shape = 's32[1]{0}', space=sflag, size = 0x4, scoped, tag = 'scoped memory for tpu_custom_call.1']
    #allocation5 [shape = 's32[1]{0}', space=sflag, size = 0x4, scoped, tag = 'scoped memory for tpu_custom_call.1']
    #allocation6 [shape = 'u8[512]{0}', space=smem, size = 0x200, scoped, tag = 'input window, operand 1, single buffered']
    #allocation7 [shape = 'u8[16384]{0}', space=vmem, size = 0x4000, scoped, tag = 'output window, operand 0, single buffered']
    %7 = vsyncpa [#allocation3], 0
    %8 = vsyncpa [#allocation5], 0
    %9 = vsyncpa [#allocation4], 0
    // Predicated region
    $region2: #{tpu_custom_call.1} parent=1 // pred_check
      _
    $region3: #{tpu_custom_call.1} parent=1 // pred_check_branch
      %11 = sbr.rel (0) target = $region5
    $region4: #{tpu_custom_call.1} parent=1 // pred_region
      %s13 = ssub.s32 768, 768
      %14 = vsyncadd [#allocation3], %s13
      %s15 = sshll.u32 [#allocation2], 4
      %s16 = int_to_ptr.vmem [resolvable:$true] %s15
      %21 = dma.hbm_to_vmem [thread:$0]  %s0, 768, %s16, [#allocation3], 128, 128, 8
    $region5: #{tpu_custom_call.1} parent=1 // pred_fallthru
      _
    // Predicated region
    $region6: #{tpu_custom_call.1} parent=1 // pred_check
      _
    $region7: #{tpu_custom_call.1} parent=1 // pred_check_branch
      %23 = sbr.rel (0) target = $region9
    $region8: #{tpu_custom_call.1} parent=1 // pred_region
      %s25 = ssub.s32 16, 16
      %26 = vsyncadd [#allocation5], %s25
      %s28 = sshll.u32 %s1, 4
      %s29 = int_to_ptr.vmem [resolvable:$true] %s28
      %31 = dma.vmem_to_smem %s29, 16, [#allocation6], [#allocation5]
    $region9: #{tpu_custom_call.1} parent=1 // pred_fallthru
      _
    // Predicated region
    $region10: #{tpu_custom_call.1} parent=1 // pred_check
      _
    $region11: #{tpu_custom_call.1} parent=1 // pred_check_branch
      %33 = sbr.rel (0) target = $region13
    $region12: #{tpu_custom_call.1} parent=1 // pred_region
      %34 = dma.done [#allocation3], 768
    $region13: #{tpu_custom_call.1} parent=1 // pred_fallthru
      _
    // Predicated region
    $region14: #{tpu_custom_call.1} parent=1 // pred_check
      _
    $region15: #{tpu_custom_call.1} parent=1 // pred_check_branch
      %36 = sbr.rel (0) target = $region17
    $region16: #{tpu_custom_call.1} parent=1 // pred_region
      %37 = dma.done [#allocation5], 16
    $region17: #{tpu_custom_call.1} parent=1 // pred_fallthru
      _
    %38 = sfence
    %v39 = vld [vmem:[#allocation2] sm:$0xff]
    %v40 = vld [vmem:[#allocation2 + $0x8] sm:$0xff]
    %s41 = scalar_lea.vmem [#allocation2], 16
    %v42 = vld [vmem:[%s41] sm:$0xff]
    %v43 = vld [vmem:[%s41 + $0x8] sm:$0xff]
    %s44 = scalar_lea.vmem [#allocation2], 32
    %v45 = vld [vmem:[%s44] sm:$0xff]
    %v46 = vld [vmem:[%s44 + $0x8] sm:$0xff]
    %s47 = sld [smem:[#allocation6]]
    %s48 = sld [smem:[#allocation6 + $0x1]]
    %s49 = sld [smem:[#allocation6 + $0x2]]
    %s50 = sld [smem:[#allocation6 + $0x3]]
    %s51 = sld [smem:[#allocation6 + $0x4]]
    %s52 = sld [smem:[#allocation6 + $0x5]]
    %s53 = sld [smem:[#allocation6 + $0x6]]
    %s54 = sld [smem:[#allocation6 + $0x7]]
    %v55 = vstv %s47
    %v56 = vmul.f32 %v39, %v55
    %v57 = vmul.f32 %v40, %v55
    %v58 = vstv %s49
    %v59 = vmul.f32 %v42, %v58
    %v60 = vmul.f32 %v43, %v58
    %v61 = vadd.f32 %v56, %v59
    %v62 = vadd.f32 %v57, %v60
    %v63 = vstv %s51
    %v64 = vmul.f32 %v45, %v63
    %v65 = vmul.f32 %v46, %v63
    %v66 = vadd.f32 %v61, %v64
    %v67 = vadd.f32 %v62, %v65
    %v68 = vstv %s53
    %v69 = vadd.f32 %v66, %v68
    %v70 = vadd.f32 %v67, %v68
    %v71 = vtanh.pop %v69
    %v72 = vtanh.pop %v70
    %73 = vst [vmem:[#allocation7] sm:$0xff] %v71
    %74 = vst [vmem:[#allocation7 + $0x8] sm:$0xff] %v72
    %v75 = vstv %s48
    %v76 = vmul.f32 %v39, %v75
    %v77 = vmul.f32 %v40, %v75
    %v78 = vstv %s50
    %v79 = vmul.f32 %v42, %v78
    %v80 = vmul.f32 %v43, %v78
    %v81 = vadd.f32 %v76, %v79
    %v82 = vadd.f32 %v77, %v80
    %v83 = vstv %s52
    %v84 = vmul.f32 %v45, %v83
    %v85 = vmul.f32 %v46, %v83
    %v86 = vadd.f32 %v81, %v84
    %v87 = vadd.f32 %v82, %v85
    %v88 = vstv %s54
    %v89 = vadd.f32 %v86, %v88
    %v90 = vadd.f32 %v87, %v88
    %v91 = vtanh.pop %v89
    %v92 = vtanh.pop %v90
    %s93 = scalar_lea.vmem [#allocation7], 16
    %94 = vst [vmem:[%s93] sm:$0xff] %v91
    %95 = vst [vmem:[%s93 + $0x8] sm:$0xff] %v92
    // Predicated region
    $region18: #{tpu_custom_call.1} parent=1 // pred_check
      _
    $region19: #{tpu_custom_call.1} parent=1 // pred_check_branch
      %97 = sbr.rel (0) target = $region21
    $region20: #{tpu_custom_call.1} parent=1 // pred_region
      %s99 = ssub.s32 512, 512
      %100 = vsyncadd [#allocation4], %s99
      %s101 = sshll.u32 [#allocation7], 4
      %s102 = int_to_ptr.vmem [resolvable:$true] %s101
      %107 = dma.vmem_to_hbm [thread:$0]  %s102, 512, %s2, [#allocation4], 128, 128, 8
    $region21: #{tpu_custom_call.1} parent=1 // pred_fallthru
      _
    // Predicated region
    $region22: #{tpu_custom_call.1} parent=1 // pred_check
      _
    $region23: #{tpu_custom_call.1} parent=1 // pred_check_branch
      %109 = sbr.rel (0) target = $region25
    $region24: #{tpu_custom_call.1} parent=1 // pred_region
      %110 = dma.done [#allocation4], 512
    $region25: #{tpu_custom_call.1} parent=1 // pred_fallthru
      _
    %111 = vsyncpa [#allocation3], 1
    %112 = vsyncpa [#allocation4], 1
    %113 = vsyncpa [#allocation5], 1

</llo_original>
